<compile_context>
chip_gen: v6e
topology: v6e:2x2x1
jax: 0.10.0
libtpu: 0.0.40
codegen_flags: <defaults>
</compile_context>

<pallas_src>
import functools

import jax
import jax.numpy as jnp
from jax.experimental import pallas as pl
from jax.experimental.pallas import tpu as pltpu


def _round_up(x, m):
    return (x + m - 1) // m * m


def mlp_kernel(x_ref, w1_ref, b1_ref, w2_ref, b2_ref, o_ref):
    # Layer 1: MXU matmul (inputs already in the MXU dtype), fp32 accumulate.
    h = jnp.dot(x_ref[...], w1_ref[...], preferred_element_type=jnp.float32)
    # Bias add + ReLU in fp32 on the VPU (v5e-safe).
    h = jnp.maximum(h + b1_ref[...], 0.0)
    # Layer 2: MXU matmul, fp32 accumulate, fp32 bias add.
    o = jnp.dot(h.astype(w2_ref.dtype), w2_ref[...],
                preferred_element_type=jnp.float32)
    o_ref[...] = (o + b2_ref[...]).astype(o_ref.dtype)


def prepare_params(w1, b1, w2, b2, *, mxu_dtype=jnp.bfloat16):
    """One-time weight prep (hoisted out of the per-call path).

    Weights are cast to the MXU input dtype; biases stay fp32 (added after the
    fp32-accumulated matmul) and are reshaped to (1, features) for broadcast.
    """
    w1p = w1.astype(mxu_dtype)
    w2p = w2.astype(mxu_dtype)
    b1p = b1.reshape(1, -1).astype(jnp.float32)
    b2p = b2.reshape(1, -1).astype(jnp.float32)
    return w1p, b1p, w2p, b2p


def sales_predictor_forward(x, w1, b1, w2, b2, *, block_batch=2048,
                            vmem_limit_bytes=None):
    """Forward pass of SalesPredictor.

    x:  (B, input_dim)
    w1: (input_dim, hidden)   b1: (1, hidden)      (from prepare_params)
    w2: (hidden, output_dim)  b2: (1, output_dim)
    Returns (B, output_dim) in x.dtype.
    """
    B, d_in = x.shape
    d_in_w, hidden = w1.shape
    hidden_w, d_out = w2.shape
    assert d_in == d_in_w and hidden == hidden_w
    assert b1.shape == (1, hidden) and b2.shape == (1, d_out)

    # Per-call cast of the streaming input to the MXU dtype (halves HBM bytes
    # when the weights were prepared in bf16); no lane/batch padding.
    mxu_dtype = w1.dtype
    xk = x.astype(mxu_dtype)

    # Batch tile: multiple of 8 sublanes, capped at block_batch rows.  The
    # grid covers B with a possibly-ragged last tile (handled by Pallas).
    tb = min(block_batch, _round_up(B, 8))
    grid = (pl.cdiv(B, tb),)

    return pl.pallas_call(
        mlp_kernel,
        out_shape=jax.ShapeDtypeStruct((B, d_out), x.dtype),
        grid=grid,
        in_specs=[
            pl.BlockSpec((tb, d_in), lambda i: (i, 0)),      # x: batch-tiled
            pl.BlockSpec((d_in, hidden), lambda i: (0, 0)),  # W1: resident
            pl.BlockSpec((1, hidden), lambda i: (0, 0)),     # b1: resident
            pl.BlockSpec((hidden, d_out), lambda i: (0, 0)), # W2: resident
            pl.BlockSpec((1, d_out), lambda i: (0, 0)),      # b2: resident
        ],
        out_specs=pl.BlockSpec((tb, d_out), lambda i: (i, 0)),
        compiler_params=pltpu.CompilerParams(
            dimension_semantics=("parallel",),  # batch tiles shard over TCs (v7x)
            vmem_limit_bytes=vmem_limit_bytes,
        ),
    )(xk, w1, b1, w2, b2)


def init_params(key, input_dim, hidden_dim, output_dim, dtype=jnp.float32):
    """Deterministic init mimicking PyTorch nn.Linear (uniform +-1/sqrt(fan_in))."""
    k1, k2, k3, k4 = jax.random.split(key, 4)
    lim1 = 1.0 / (input_dim ** 0.5)
    lim2 = 1.0 / (hidden_dim ** 0.5)
    # stored as (in, out) so the kernel computes x @ W
    w1 = jax.random.uniform(k1, (input_dim, hidden_dim), dtype, -lim1, lim1)
    b1 = jax.random.uniform(k2, (1, hidden_dim), dtype, -lim1, lim1)
    w2 = jax.random.uniform(k3, (hidden_dim, output_dim), dtype, -lim2, lim2)
    b2 = jax.random.uniform(k4, (1, output_dim), dtype, -lim2, lim2)
    return w1, b1, w2, b2


def reference_forward(x, w1, b1, w2, b2):
    h = jnp.maximum(x @ w1 + b1, 0.0)
    return h @ w2 + b2


if __name__ == "__main__":
    key = jax.random.PRNGKey(0)
    kx, kp = jax.random.split(key)

    batch, input_dim, hidden_dim, output_dim = 8, 16, 32, 4
    x = jax.random.normal(kx, (batch, input_dim), jnp.float32)
    w1, b1, w2, b2 = init_params(kp, input_dim, hidden_dim, output_dim)

    ref = reference_forward(x, w1, b1, w2, b2)

    # Default bf16 MXU path (fp32 accumulate): loose tolerance vs fp32 reference.
    params_bf16 = prepare_params(w1, b1, w2, b2, mxu_dtype=jnp.bfloat16)
    fwd = jax.jit(functools.partial(sales_predictor_forward, block_batch=2048))
    out = jax.block_until_ready(fwd(x, *params_bf16))
    assert out.shape == (batch, output_dim)
    assert out.dtype == x.dtype
    assert jnp.allclose(out, ref, atol=5e-2, rtol=5e-2)

    # fp32 MXU path: exact check against the reference.
    params_f32 = prepare_params(w1, b1, w2, b2, mxu_dtype=jnp.float32)
    out32 = jax.block_until_ready(sales_predictor_forward(x, *params_f32))
    assert jnp.allclose(out32, ref, atol=1e-5, rtol=1e-5)

    print("KERNEL_OK")
</pallas_src>

<mosaic_0001>
module attributes {stable_mosaic.version = 11 : i64} {
  func.func @mlp_kernel(%arg0: i32, %arg1: memref<8x16xbf16, #tpu.memory_space<vmem>>, %arg2: memref<16x32xbf16, #tpu.memory_space<vmem>>, %arg3: memref<1x32xf32, #tpu.memory_space<vmem>>, %arg4: memref<32x4xbf16, #tpu.memory_space<vmem>>, %arg5: memref<1x4xf32, #tpu.memory_space<vmem>>, %arg6: memref<8x4xf32, #tpu.memory_space<vmem>>) attributes {dimension_semantics = [#tpu.dimension_semantics<parallel>], iteration_bounds = array<i64: 1>, scalar_prefetch = 0 : i64, scratch_operands = 0 : i64, tpu.core_type = #tpu.core_type<tc>, window_params = [{transform_indices = @transform_0, window_bounds = array<i64: 8, 16>}, {pipeline_mode = #tpu.pipeline_mode<synchronous>, transform_indices = @transform_1, window_bounds = array<i64: 16, 32>}, {pipeline_mode = #tpu.pipeline_mode<synchronous>, transform_indices = @transform_2, window_bounds = array<i64: 1, 32>}, {pipeline_mode = #tpu.pipeline_mode<synchronous>, transform_indices = @transform_3, window_bounds = array<i64: 32, 4>}, {pipeline_mode = #tpu.pipeline_mode<synchronous>, transform_indices = @transform_4, window_bounds = array<i64: 1, 4>}, {transform_indices = @transform_5, window_bounds = array<i64: 8, 4>}]} {
    %c0 = arith.constant 0 : index
    %c0_0 = arith.constant 0 : index
    %0 = vector.load %arg1[%c0, %c0_0] : memref<8x16xbf16, #tpu.memory_space<vmem>>, vector<8x16xbf16>
    %c0_1 = arith.constant 0 : index
    %c0_2 = arith.constant 0 : index
    %1 = vector.load %arg2[%c0_1, %c0_2] : memref<16x32xbf16, #tpu.memory_space<vmem>>, vector<16x32xbf16>
    %cst = arith.constant dense<0.000000e+00> : vector<8x32xf32>
    %2 = tpu.matmul %0, %1, %cst {dimension_numbers = #tpu.dot_dimension_numbers<[1], [0], [0], [1], [0, 0, 1, 1], [], []>} : vector<8x16xbf16>, vector<16x32xbf16>, vector<8x32xf32> -> vector<8x32xf32>
    %c0_3 = arith.constant 0 : index
    %c0_4 = arith.constant 0 : index
    %3 = vector.load %arg3[%c0_3, %c0_4] : memref<1x32xf32, #tpu.memory_space<vmem>>, vector<1x32xf32>
    %4 = vector.broadcast %3 : vector<1x32xf32> to vector<8x32xf32>
    %5 = arith.addf %2, %4 : vector<8x32xf32>
    %cst_5 = arith.constant 0.000000e+00 : f32
    %6 = vector.broadcast %cst_5 : f32 to vector<8x32xf32>
    %7 = arith.maximumf %5, %6 : vector<8x32xf32>
    %8 = arith.truncf %7 : vector<8x32xf32> to vector<8x32xbf16>
    %c0_6 = arith.constant 0 : index
    %c0_7 = arith.constant 0 : index
    %9 = vector.load %arg4[%c0_6, %c0_7] : memref<32x4xbf16, #tpu.memory_space<vmem>>, vector<32x4xbf16>
    %cst_8 = arith.constant dense<0.000000e+00> : vector<8x4xf32>
    %10 = tpu.matmul %8, %9, %cst_8 {dimension_numbers = #tpu.dot_dimension_numbers<[1], [0], [0], [1], [0, 0, 1, 1], [], []>} : vector<8x32xbf16>, vector<32x4xbf16>, vector<8x4xf32> -> vector<8x4xf32>
    %c0_9 = arith.constant 0 : index
    %c0_10 = arith.constant 0 : index
    %11 = vector.load %arg5[%c0_9, %c0_10] : memref<1x4xf32, #tpu.memory_space<vmem>>, vector<1x4xf32>
    %12 = vector.broadcast %11 : vector<1x4xf32> to vector<8x4xf32>
    %13 = arith.addf %10, %12 : vector<8x4xf32>
    %c0_11 = arith.constant 0 : index
    %c0_12 = arith.constant 0 : index
    %14 = vector.load %arg6[%c0_11, %c0_12] : memref<8x4xf32, #tpu.memory_space<vmem>>, vector<8x4xf32>
    tpu.vector_store %arg6[%c0_11, %c0_12], %13 {strides = array<i32>} : memref<8x4xf32, #tpu.memory_space<vmem>>, vector<8x4xf32>,
    return
  }
  func.func @transform_0(%arg0: i32) -> (i32, i32) {
    %c0_i32 = arith.constant 0 : i32
    %c0_i32_0 = arith.constant 0 : i32
    return %arg0, %c0_i32 : i32, i32
  }
  func.func @transform_1(%arg0: i32) -> (i32, i32) {
    %c0_i32 = arith.constant 0 : i32
    %c0_i32_0 = arith.constant 0 : i32
    %c0_i32_1 = arith.constant 0 : i32
    return %c0_i32, %c0_i32_0 : i32, i32
  }
  func.func @transform_2(%arg0: i32) -> (i32, i32) {
    %c0_i32 = arith.constant 0 : i32
    %c0_i32_0 = arith.constant 0 : i32
    %c0_i32_1 = arith.constant 0 : i32
    return %c0_i32, %c0_i32_0 : i32, i32
  }
  func.func @transform_3(%arg0: i32) -> (i32, i32) {
    %c0_i32 = arith.constant 0 : i32
    %c0_i32_0 = arith.constant 0 : i32
    %c0_i32_1 = arith.constant 0 : i32
    return %c0_i32, %c0_i32_0 : i32, i32
  }
  func.func @transform_4(%arg0: i32) -> (i32, i32) {
    %c0_i32 = arith.constant 0 : i32
    %c0_i32_0 = arith.constant 0 : i32
    %c0_i32_1 = arith.constant 0 : i32
    return %c0_i32, %c0_i32_0 : i32, i32
  }
  func.func @transform_5(%arg0: i32) -> (i32, i32) {
    %c0_i32 = arith.constant 0 : i32
    %c0_i32_0 = arith.constant 0 : i32
    return %arg0, %c0_i32 : i32, i32
  }
}

</mosaic_0001>

<llo_original>
// kernel: sales_predictor_forward.1
$region0: #{sales_predictor_forward.1}
  #allocation0 [shape = 'u32[]', space=smem, size = 0x4, offset = 0x4, fixed_abs, tag = 'smem constant byte address 0x4 - core index']
  #allocation1 [shape = 'u32[144,128]{1,0:T(1,128)}', space=vmem, size = 0x12000, scoped, tag = 'internal scratch']
  %s0 = inlined_call_operand.vmem [shape: bf16[8,16], index: 0, kind: input, shape index: {}]
  %s1 = inlined_call_operand.vmem [shape: bf16[16,32], index: 1, kind: input, shape index: {}]
  %s2 = inlined_call_operand.vmem [shape: f32[1,32], index: 2, kind: input, shape index: {}]
  %s3 = inlined_call_operand.vmem [shape: bf16[32,4], index: 3, kind: input, shape index: {}]
  %s4 = inlined_call_operand.vmem [shape: f32[1,4], index: 4, kind: input, shape index: {}]
  %s5 = inlined_call_operand.vmem [shape: f32[8,4], index: 5, kind: output, shape index: {}]
  %s6 = sld [smem:[#allocation0]]
  $region30: #{sales_predictor_forward.1} parent=0
    _
  %s8 = ssub.s32 1, %s6
  %s9 = scalar_select 0, %s8, %s6
  // Predicated region
  $region2: #{sales_predictor_forward.1} parent=0 // pred_check
    _
  $region3: #{sales_predictor_forward.1} parent=0 // pred_check_branch
    %11 = sbr.rel (0) target = $region5
  $region4: #{sales_predictor_forward.1} parent=0 // pred_region
    _
  $region5: #{sales_predictor_forward.1} parent=0 // pred_fallthru
    _
  // Predicated region
  $region6: #{sales_predictor_forward.1} parent=0 // pred_check
    _
  $region7: #{sales_predictor_forward.1} parent=0 // pred_check_branch
    %13 = sbr.rel (0) target = $region9
  $region8: #{sales_predictor_forward.1} parent=0 // pred_region
    _
  $region9: #{sales_predictor_forward.1} parent=0 // pred_fallthru
    _
  // Predicated region
  $region10: #{sales_predictor_forward.1} parent=0 // pred_check
    _
  $region11: #{sales_predictor_forward.1} parent=0 // pred_check_branch
    %15 = sbr.rel (0) target = $region13
  $region12: #{sales_predictor_forward.1} parent=0 // pred_region
    _
  $region13: #{sales_predictor_forward.1} parent=0 // pred_fallthru
    _
  // Predicated region
  $region14: #{sales_predictor_forward.1} parent=0 // pred_check
    _
  $region15: #{sales_predictor_forward.1} parent=0 // pred_check_branch
    %17 = sbr.rel (0) target = $region17
  $region16: #{sales_predictor_forward.1} parent=0 // pred_region
    _
  $region17: #{sales_predictor_forward.1} parent=0 // pred_fallthru
    _
  // Predicated region
  $region18: #{sales_predictor_forward.1} parent=0 // pred_check
    _
  $region19: #{sales_predictor_forward.1} parent=0 // pred_check_branch
    %19 = sbr.rel (0) target = $region21
  $region20: #{sales_predictor_forward.1} parent=0 // pred_region
    _
  $region21: #{sales_predictor_forward.1} parent=0 // pred_fallthru
    _
  %v21 = vld [vmem:[%s0] sm:$0xf]
  %v22 = vld [vmem:[%s1] sm:$0xf]
  %v23 = vld [vmem:[%s1 + $0x4] sm:$0xf]
  %v24 = vld [vmem:[%s2] sm:$0x1]
  %v26 = vlaneseq
  %v27 = vshrl.u32 %v26, 7
  %v28 = vsub.s32 0, %v27
  %v29 = vrot.slane %v24, %v28
  %v33 = vunpack.c.l.b16 %v22
  %v34 = vunpack.c.l.b16 %v23
  %v35 = vpack.c.b16 %v34, %v33
  %vm37 = vcmask 130048
  %v39 = vsel %vm37, %v21, 0
  %41 = vmatprep.subr.bf16.mxu0 0
  %42 = vmatpush1.bf16.msra.mxu0 0
  %43 = vmatprep.subr.bf16.mxu0 0
  %44 = vmatpush1.bf16.msra.mxu0 0
  %45 = vmatprep.subr.bf16.mxu0 0
  %46 = vmatpush1.bf16.msra.mxu0 0
  %47 = vmatprep.subr.bf16.mxu0 0
  %48 = vmatpush1.bf16.msra.mxu0 0
  %49 = vmatprep.subr.bf16.mxu0 0
  %50 = vmatpush1.bf16.msra.mxu0 0
  %51 = vmatprep.subr.bf16.mxu0 0
  %52 = vmatpush1.bf16.msra.mxu0 0
  %53 = vmatprep.subr.bf16.mxu0 0
  %54 = vmatpush1.bf16.msra.mxu0 0
  %55 = vmatprep.subr.bf16.mxu0 0
  %56 = vmatpush1.bf16.msra.mxu0 %v35
  %57 = vmatprep.subr.bf16.mxu0 0
  %58 = vmatpush2.bf16.msra.mxu0 0
  %59 = vmatprep.subr.bf16.mxu0 0
  %60 = vmatpush2.bf16.msra.mxu0 0
  %61 = vmatprep.subr.bf16.mxu0 0
  %62 = vmatpush2.bf16.msra.mxu0 0
  %63 = vmatprep.subr.bf16.mxu0 0
  %64 = vmatpush2.bf16.msra.mxu0 0
  %65 = vmatprep.subr.bf16.mxu0 0
  %66 = vmatpush2.bf16.msra.mxu0 0
  %67 = vmatprep.subr.bf16.mxu0 0
  %68 = vmatpush2.bf16.msra.mxu0 0
  %69 = vmatprep.subr.bf16.mxu0 0
  %70 = vmatpush2.bf16.msra.mxu0 0
  %71 = vmatprep.subr.bf16.mxu0 0
  %72 = vmatpush2.bf16.msra.mxu0 0
  %73 = vmatprep.mubr.bf16.mxu0 0
  %74 = vmatmul.mubr.bf16.gmra.mxu0 %v39
  %v75 = vpop.f32.mrf.mxu0
  %v76 = vadd.f32 %v29, %v75
  %v77 = vpop.f32.mrf.mxu0
  %v78 = vpop.f32.mrf.mxu0
  %v79 = vpop.f32.mrf.mxu0
  %80 = vdwg.mxu0
  %v81 = vmax.f32 %v76, 0.0
  %v82 = vpack.c.bf16 %v81, %v81
  %v83 = vld [vmem:[%s3] sm:$0xf]
  %v84 = vld [vmem:[%s3 + $0x4] sm:$0xf]
  %v85 = vld [vmem:[%s3 + $0x8] sm:$0xf]
  %v86 = vld [vmem:[%s3 + $0xc] sm:$0xf]
  %v87 = vld [vmem:[%s4] sm:$0x1]
  %v89 = vlaneseq
  %v90 = vshrl.u32 %v89, 7
  %v91 = vsub.s32 0, %v90
  %v92 = vrot.slane %v87, %v91
  %v98 = vunpack.c.l.b16 %v83
  %v99 = vunpack.c.l.b16 %v84
  %v100 = vunpack.c.l.b16 %v85
  %v101 = vunpack.c.l.b16 %v86
  %v102 = vpack.c.b16 %v99, %v98
  %v103 = vpack.c.b16 %v101, %v100
  %vm106 = vcmask 261120
  %v108 = vsel %vm106, %v82, 0
  %110 = vmatprep.subr.bf16.mxu0 0
  %111 = vmatpush1.bf16.msra.mxu0 0
  %112 = vmatprep.subr.bf16.mxu0 0
  %113 = vmatpush1.bf16.msra.mxu0 0
  %114 = vmatprep.subr.bf16.mxu0 0
  %115 = vmatpush1.bf16.msra.mxu0 0
  %116 = vmatprep.subr.bf16.mxu0 0
  %117 = vmatpush1.bf16.msra.mxu0 0
  %118 = vmatprep.subr.bf16.mxu0 0
  %119 = vmatpush1.bf16.msra.mxu0 0
  %120 = vmatprep.subr.bf16.mxu0 0
  %121 = vmatpush1.bf16.msra.mxu0 0
  %122 = vmatprep.subr.bf16.mxu0 0
  %123 = vmatpush1.bf16.msra.mxu0 %v103
  %124 = vmatprep.subr.bf16.mxu0 0
  %125 = vmatpush1.bf16.msra.mxu0 %v102
  %126 = vmatprep.subr.bf16.mxu0 0
  %127 = vmatpush2.bf16.msra.mxu0 0
  %128 = vmatprep.subr.bf16.mxu0 0
  %129 = vmatpush2.bf16.msra.mxu0 0
  %130 = vmatprep.subr.bf16.mxu0 0
  %131 = vmatpush2.bf16.msra.mxu0 0
  %132 = vmatprep.subr.bf16.mxu0 0
  %133 = vmatpush2.bf16.msra.mxu0 0
  %134 = vmatprep.subr.bf16.mxu0 0
  %135 = vmatpush2.bf16.msra.mxu0 0
  %136 = vmatprep.subr.bf16.mxu0 0
  %137 = vmatpush2.bf16.msra.mxu0 0
  %138 = vmatprep.subr.bf16.mxu0 0
  %139 = vmatpush2.bf16.msra.mxu0 0
  %140 = vmatprep.subr.bf16.mxu0 0
  %141 = vmatpush2.bf16.msra.mxu0 0
  %142 = vmatprep.mubr.bf16.mxu0 0
  %143 = vmatmul.mubr.bf16.gmra.mxu0 %v108
  %v144 = vpop.f32.mrf.mxu0
  %v145 = vadd.f32 %v92, %v144
  %v146 = vpop.f32.mrf.mxu0
  %v147 = vpop.f32.mrf.mxu0
  %v148 = vpop.f32.mrf.mxu0
  %149 = vdwg.mxu0
  %vm150 = vcmask 31744
  %151 = vst.msk [vmem:[%s5] sm:$0xff] %vm150, %v145
  // Predicated region
  $region22: #{sales_predictor_forward.1} parent=0 // pred_check
    _
  $region23: #{sales_predictor_forward.1} parent=0 // pred_check_branch
    %153 = sbr.rel (0) target = $region25
  $region24: #{sales_predictor_forward.1} parent=0 // pred_region
    _
  $region25: #{sales_predictor_forward.1} parent=0 // pred_fallthru
    _
  // Predicated region
  $region26: #{sales_predictor_forward.1} parent=0 // pred_check
    _
  $region27: #{sales_predictor_forward.1} parent=0 // pred_check_branch
    %155 = sbr.rel (0) target = $region29
  $region28: #{sales_predictor_forward.1} parent=0 // pred_region
    _
  $region29: #{sales_predictor_forward.1} parent=0 // pred_fallthru
    _

</llo_original>
